<compile_context>
chip_gen: v7x
topology: tpu7x:2x2x1
jax: 0.10.0
libtpu: 0.0.40
codegen_flags: <defaults>
</compile_context>

<pallas_src>
import jax
import jax.numpy as jnp
from jax.experimental import pallas as pl
from jax.experimental.pallas import tpu as pltpu


_LANES = 128
# 2048 lane-rows * 128 lanes * 4 B = 1 MiB per f32 input block.  With at most
# 3 input streams double-buffered this is ~6 MiB of VMEM: safely under the
# smallest scoped-VMEM default (16 MiB on v5e, 32 MiB on v6e/v7x) while being
# past the ~85%-of-HBM-roofline block-size knee, so no vmem_limit_bytes needed.
_MAX_BLOCK_ROWS = 2048


def _partial_sums_kernel_default(x_ref, t_ref, num_ref, den_ref):
    """target_next == 0 path:  diff = 0 - |target| = -|target|."""
    x = x_ref[...].astype(jnp.float32)
    diff = -jnp.abs(t_ref[...].astype(jnp.float32))
    # torch: signs = x / |x|;  |x| * diff * signs == x * diff, which removes the
    # full-tile divide (differs from torch only at x == 0, where torch is NaN).
    num = jnp.sum(x * diff)
    den = jnp.sum(jnp.abs(x) * diff)
    num_ref[...] = jnp.broadcast_to(num, num_ref.shape)
    den_ref[...] = jnp.broadcast_to(den, den_ref.shape)


def _partial_sums_kernel_tn(x_ref, t_ref, tn_ref, num_ref, den_ref):
    """Explicit target_next path:  diff = |target_next| - |target|."""
    x = x_ref[...].astype(jnp.float32)
    diff = (jnp.abs(tn_ref[...].astype(jnp.float32))
            - jnp.abs(t_ref[...].astype(jnp.float32)))
    num = jnp.sum(x * diff)
    den = jnp.sum(jnp.abs(x) * diff)
    num_ref[...] = jnp.broadcast_to(num, num_ref.shape)
    den_ref[...] = jnp.broadcast_to(den, den_ref.shape)


def _round_up(x, m):
    return ((x + m - 1) // m) * m


def _sublane_multiple(*arrays):
    # native sublane tiling: f32 -> 8, bf16/f16 -> 16, int8/fp8 -> 32
    return max(32 // jnp.dtype(a.dtype).itemsize for a in arrays)


def _to_lane_major(a, rows_padded):
    """Flatten to 1-D, zero-pad, reshape to a lane-dense (rows, 128) slab."""
    flat = a.reshape(-1)
    pad = rows_padded * _LANES - flat.shape[0]
    if pad:
        flat = jnp.pad(flat, (0, pad))        # zero pad -> zero contribution
    return flat.reshape(rows_padded, _LANES)


def stock_loss_global_norm(nn_output, target, target_next=None,
                           extra_node=False):
    """Pallas TPU forward pass of DeformTime `stock_loss_global_norm`."""
    if nn_output.ndim != 3:
        raise ValueError("expected (batch, seq, features) inputs")

    if extra_node:
        # PyTorch drops the last feature of nn_output / signs only; it only
        # type-checks when `target` already has one fewer feature column.
        nn_output = nn_output[:, :, :-1]
    if nn_output.shape != target.shape:
        raise ValueError("nn_output / target shape mismatch")

    inputs = [nn_output, target]
    kernel = _partial_sums_kernel_default
    if target_next is not None:
        if target_next.shape != target.shape:
            raise ValueError("target_next / target shape mismatch")
        inputs.append(target_next)
        kernel = _partial_sums_kernel_tn

    n = nn_output.size
    rows = -(-n // _LANES)                                # ceil(n / 128)
    sub = _sublane_multiple(*inputs)
    num_blocks = -(-rows // _MAX_BLOCK_ROWS)
    block_rows = _round_up(-(-rows // num_blocks), sub)
    rows_padded = num_blocks * block_rows

    lane_inputs = [_to_lane_major(a, rows_padded) for a in inputs]

    in_spec = pl.BlockSpec((block_rows, _LANES), lambda g: (g, 0))
    # Lane-dense (8, 128) partial-sum tile per grid step; only [g, 0, 0] is read.
    out_spec = pl.BlockSpec((1, 8, _LANES), lambda g: (g, 0, 0))
    out_shape = jax.ShapeDtypeStruct((num_blocks, 8, _LANES), jnp.float32)

    num_out, den_out = pl.pallas_call(
        kernel,
        out_shape=(out_shape, out_shape),
        grid_spec=pltpu.PrefetchScalarGridSpec(
            num_scalar_prefetch=0,
            grid=(num_blocks,),
            in_specs=[in_spec] * len(lane_inputs),
            out_specs=(out_spec, out_spec),
        ),
        compiler_params=pltpu.CompilerParams(
            dimension_semantics=("parallel",)),
    )(*lane_inputs)

    num = jnp.sum(num_out[:, 0, 0])
    den = jnp.sum(den_out[:, 0, 0])
    return -(num / den)


def _reference(nn_output, target, target_next=None, extra_node=False):
    """Pure-JAX mirror of the PyTorch forward (same op order)."""
    x = nn_output.astype(jnp.float32)
    signs = x / jnp.abs(x)
    if target_next is None:
        target_next = jnp.zeros_like(target)
    tgt = jnp.abs(target.astype(jnp.float32))
    tgt_next = jnp.abs(target_next.astype(jnp.float32))
    if extra_node:
        x = x[:, :, :-1]
        signs = signs[:, :, :-1]
    diff = (tgt_next - tgt).reshape(-1)
    abs_x = jnp.abs(x).reshape(-1)
    denom = jnp.dot(abs_x, diff)
    return -jnp.sum(abs_x * diff * signs.reshape(-1) / denom)


def _close(a, b, tol=1e-4):
    return jnp.abs(a - b) <= tol * jnp.maximum(1.0, jnp.abs(b))


if __name__ == "__main__":
    key = jax.random.PRNGKey(0)
    k1, k2, k3, k4, k5, k6 = jax.random.split(key, 6)

    # Small case (single block), default target_next=None path.
    B, S, F = 2, 8, 32
    x = jax.random.normal(k1, (B, S, F), dtype=jnp.float32)
    tgt = jax.random.normal(k2, (B, S, F), dtype=jnp.float32)
    loss = jax.block_until_ready(stock_loss_global_norm(x, tgt))
    ref = jax.block_until_ready(_reference(x, tgt))
    assert jnp.isfinite(loss), loss
    assert _close(loss, ref), (loss, ref)

    # Explicit target_next path (3-input kernel).
    tgt_next = 1.5 * tgt
    loss2 = jax.block_until_ready(
        stock_loss_global_norm(x, tgt, target_next=tgt_next))
    ref2 = jax.block_until_ready(_reference(x, tgt, target_next=tgt_next))
    assert _close(loss2, ref2), (loss2, ref2)

    # extra_node=True: nn_output has one extra feature that gets dropped.
    xe = jax.random.normal(k3, (B, S, F + 1), dtype=jnp.float32)
    loss3 = jax.block_until_ready(
        stock_loss_global_norm(xe, tgt, extra_node=True))
    ref3 = jax.block_until_ready(_reference(xe, tgt, extra_node=True))
    assert _close(loss3, ref3), (loss3, ref3)

    # Larger case exercising the multi-block "parallel" partial-sum path
    # (8*128*512 = 524288 elems -> 4096 lane-rows -> 2 grid blocks).
    B2, S2, F2 = 8, 128, 512
    xb = jax.random.normal(k4, (B2, S2, F2), dtype=jnp.float32)
    tb = jax.random.normal(k5, (B2, S2, F2), dtype=jnp.float32)
    loss4 = jax.block_until_ready(stock_loss_global_norm(xb, tb))
    ref4 = jax.block_until_ready(_reference(xb, tb))
    assert _close(loss4, ref4), (loss4, ref4)

    print("KERNEL_OK")
</pallas_src>

<mosaic_0001>
module attributes {stable_mosaic.version = 11 : i64} {
  func.func @_partial_sums_kernel_default(%arg0: i32, %arg1: memref<8x128xf32, #tpu.memory_space<vmem>>, %arg2: memref<8x128xf32, #tpu.memory_space<vmem>>, %arg3: memref<1x8x128xf32, #tpu.memory_space<vmem>>, %arg4: memref<1x8x128xf32, #tpu.memory_space<vmem>>) attributes {dimension_semantics = [#tpu.dimension_semantics<parallel>], iteration_bounds = array<i64: 1>, scalar_prefetch = 0 : i64, scratch_operands = 0 : i64, tpu.core_type = #tpu.core_type<tc>, window_params = [{transform_indices = @transform_0, window_bounds = array<i64: 8, 128>}, {transform_indices = @transform_1, window_bounds = array<i64: 8, 128>}, {transform_indices = @transform_2, window_bounds = array<i64: 1, 8, 128>}, {transform_indices = @transform_3, window_bounds = array<i64: 1, 8, 128>}]} {
    %c0 = arith.constant 0 : index
    %c0_0 = arith.constant 0 : index
    %0 = vector.load %arg1[%c0, %c0_0] : memref<8x128xf32, #tpu.memory_space<vmem>>, vector<8x128xf32>
    %c0_1 = arith.constant 0 : index
    %c0_2 = arith.constant 0 : index
    %1 = vector.load %arg2[%c0_1, %c0_2] : memref<8x128xf32, #tpu.memory_space<vmem>>, vector<8x128xf32>
    %2 = math.absf %1 : vector<8x128xf32>
    %cst = arith.constant 0.000000e+00 : f32
    %3 = vector.broadcast %cst : f32 to vector<8x128xf32>
    %4 = arith.subf %3, %2 : vector<8x128xf32>
    %5 = arith.mulf %0, %4 : vector<8x128xf32>
    %6 = vector.shape_cast %5 : vector<8x128xf32> to vector<1x8x128xf32>
    %cst_3 = arith.constant dense<0.000000e+00> : vector<1xf32>
    %7 = vector.multi_reduction <add>, %6, %cst_3 [1, 2] : vector<1x8x128xf32> to vector<1xf32>
    %8 = vector.shape_cast %7 : vector<1xf32> to vector<1x1x1xf32>
    %9 = vector.extract %8[0, 0, 0] : f32 from vector<1x1x1xf32>
    %10 = math.absf %0 : vector<8x128xf32>
    %11 = arith.mulf %10, %4 : vector<8x128xf32>
    %12 = vector.shape_cast %11 : vector<8x128xf32> to vector<1x8x128xf32>
    %cst_4 = arith.constant dense<0.000000e+00> : vector<1xf32>
    %13 = vector.multi_reduction <add>, %12, %cst_4 [1, 2] : vector<1x8x128xf32> to vector<1xf32>
    %14 = vector.shape_cast %13 : vector<1xf32> to vector<1x1x1xf32>
    %15 = vector.extract %14[0, 0, 0] : f32 from vector<1x1x1xf32>
    %16 = vector.broadcast %9 : f32 to vector<1x8x128xf32>
    %c0_5 = arith.constant 0 : index
    %c0_6 = arith.constant 0 : index
    %c0_7 = arith.constant 0 : index
    %17 = vector.load %arg3[%c0_5, %c0_6, %c0_7] : memref<1x8x128xf32, #tpu.memory_space<vmem>>, vector<1x8x128xf32>
    tpu.vector_store %arg3[%c0_5, %c0_6, %c0_7], %16 {strides = array<i32>} : memref<1x8x128xf32, #tpu.memory_space<vmem>>, vector<1x8x128xf32>,
    %18 = vector.broadcast %15 : f32 to vector<1x8x128xf32>
    %c0_8 = arith.constant 0 : index
    %c0_9 = arith.constant 0 : index
    %c0_10 = arith.constant 0 : index
    %19 = vector.load %arg4[%c0_8, %c0_9, %c0_10] : memref<1x8x128xf32, #tpu.memory_space<vmem>>, vector<1x8x128xf32>
    tpu.vector_store %arg4[%c0_8, %c0_9, %c0_10], %18 {strides = array<i32>} : memref<1x8x128xf32, #tpu.memory_space<vmem>>, vector<1x8x128xf32>,
    return
  }
  func.func @transform_0(%arg0: i32) -> (i32, i32) {
    %c0_i32 = arith.constant 0 : i32
    %c0_i32_0 = arith.constant 0 : i32
    return %arg0, %c0_i32 : i32, i32
  }
  func.func @transform_1(%arg0: i32) -> (i32, i32) {
    %c0_i32 = arith.constant 0 : i32
    %c0_i32_0 = arith.constant 0 : i32
    return %arg0, %c0_i32 : i32, i32
  }
  func.func @transform_2(%arg0: i32) -> (i32, i32, i32) {
    %c0_i32 = arith.constant 0 : i32
    %c0_i32_0 = arith.constant 0 : i32
    %c0_i32_1 = arith.constant 0 : i32
    return %arg0, %c0_i32, %c0_i32_0 : i32, i32, i32
  }
  func.func @transform_3(%arg0: i32) -> (i32, i32, i32) {
    %c0_i32 = arith.constant 0 : i32
    %c0_i32_0 = arith.constant 0 : i32
    %c0_i32_1 = arith.constant 0 : i32
    return %arg0, %c0_i32, %c0_i32_0 : i32, i32, i32
  }
}

</mosaic_0001>

<llo_original>
// kernel: tpu_custom_call.1
$region0: #{tpu_custom_call.1}
  #allocation0 [shape = 'u32[]', space=smem, size = 0x4, offset = 0x4, fixed_abs, tag = 'smem constant byte address 0x4 - core index']
  #allocation1 [shape = 'u32[144,128]{1,0:T(1,128)}', space=vmem, size = 0x12000, scoped, tag = 'internal scratch']
  %s0 = inlined_call_operand.hbm [shape: f32[8,128], index: 0, kind: input, shape index: {}]
  %s1 = inlined_call_operand.hbm [shape: f32[8,128], index: 1, kind: input, shape index: {}]
  %s2 = inlined_call_operand.hbm [shape: f32[1,8,128], index: 2, kind: output, shape index: {0}]
  %s3 = inlined_call_operand.hbm [shape: f32[1,8,128], index: 3, kind: output, shape index: {1}]
  %4 = xla_tuple %s2, %s3
  %s5 = sld [smem:[#allocation0]]
  $region34: #{tpu_custom_call.1} parent=0
    _
  %s7 = ssub.s32 1, %s5
  %s8 = scalar_select 0, %s7, %s5
  $region1: #{tpu_custom_call.1} parent=0
    #allocation2 [shape = 'u8[4096]{0}', space=vmem, size = 0x1000, scoped, tag = 'input window, operand 0, single buffered']
    #allocation3 [shape = 's32[1]{0}', space=sflag, size = 0x4, scoped, tag = 'scoped memory for tpu_custom_call.1']
    #allocation4 [shape = 's32[1]{0}', space=sflag, size = 0x4, scoped, tag = 'scoped memory for tpu_custom_call.1']
    #allocation5 [shape = 'u8[4096]{0}', space=vmem, size = 0x1000, scoped, tag = 'input window, operand 1, single buffered']
    #allocation6 [shape = 's32[1]{0}', space=sflag, size = 0x4, scoped, tag = 'scoped memory for tpu_custom_call.1']
    #allocation7 [shape = 'u8[4096]{0}', space=vmem, size = 0x1000, scoped, tag = 'output window, operand 0, single buffered']
    #allocation8 [shape = 'u8[4096]{0}', space=vmem, size = 0x1000, scoped, tag = 'output window, operand 1, single buffered']
    #allocation9 [shape = 's32[1]{0}', space=sflag, size = 0x4, scoped, tag = 'scoped memory for tpu_custom_call.1']
    %9 = vsyncpa [#allocation3], 0
    %10 = vsyncpa [#allocation6], 0
    %11 = vsyncpa [#allocation4], 0
    %12 = vsyncpa [#allocation9], 0
    // Predicated region
    $region2: #{tpu_custom_call.1} parent=1 // pred_check
      _
    $region3: #{tpu_custom_call.1} parent=1 // pred_check_branch
      %14 = sbr.rel (0) target = $region5
    $region4: #{tpu_custom_call.1} parent=1 // pred_region
      %s16 = ssub.s32 128, 128
      %17 = vsyncadd [#allocation3], %s16
      %s19 = sshll.u32 [#allocation2], 4
      %s20 = int_to_ptr.vmem [resolvable:$true] %s19
      %22 = dma.hbm_to_vmem [thread:$0]  %s0, 128, %s20, [#allocation3]
    $region5: #{tpu_custom_call.1} parent=1 // pred_fallthru
      _
    // Predicated region
    $region6: #{tpu_custom_call.1} parent=1 // pred_check
      _
    $region7: #{tpu_custom_call.1} parent=1 // pred_check_branch
      %24 = sbr.rel (0) target = $region9
    $region8: #{tpu_custom_call.1} parent=1 // pred_region
      %s26 = ssub.s32 128, 128
      %27 = vsyncadd [#allocation6], %s26
      %s29 = sshll.u32 [#allocation5], 4
      %s30 = int_to_ptr.vmem [resolvable:$true] %s29
      %32 = dma.hbm_to_vmem [thread:$0]  %s1, 128, %s30, [#allocation6]
    $region9: #{tpu_custom_call.1} parent=1 // pred_fallthru
      _
    // Predicated region
    $region10: #{tpu_custom_call.1} parent=1 // pred_check
      _
    $region11: #{tpu_custom_call.1} parent=1 // pred_check_branch
      %34 = sbr.rel (0) target = $region13
    $region12: #{tpu_custom_call.1} parent=1 // pred_region
      %35 = dma.done [#allocation3], 128
    $region13: #{tpu_custom_call.1} parent=1 // pred_fallthru
      _
    // Predicated region
    $region14: #{tpu_custom_call.1} parent=1 // pred_check
      _
    $region15: #{tpu_custom_call.1} parent=1 // pred_check_branch
      %37 = sbr.rel (0) target = $region17
    $region16: #{tpu_custom_call.1} parent=1 // pred_region
      %38 = dma.done [#allocation6], 128
    $region17: #{tpu_custom_call.1} parent=1 // pred_fallthru
      _
    %v39 = vld [vmem:[#allocation2] sm:$0xff]
    %v40 = vld [vmem:[#allocation5] sm:$0xff]
    %v41 = vand.u32 2147483647, %v40
    %v42 = vsub.f32 0.0, %v41
    %v43 = vmul.f32 %v39, %v42
    %44 = vadd.xlane.f32.xlu0 %v43
    %v45 = vpop.xlane.xlu0 %44
    %v46 = vrot.slane %v45, 4
    %v47 = vadd.f32 %v45, %v46
    %v48 = vrot.slane %v47, 2
    %v49 = vadd.f32 %v47, %v48
    %v50 = vrot.slane %v49, 1
    %v51 = vadd.f32 %v49, %v50
    %s52 = vtos %v51
    %v53 = vand.u32 2147483647, %v39
    %v54 = vmul.f32 %v53, %v42
    %55 = vadd.xlane.f32.xlu0 %v54
    %v56 = vpop.xlane.xlu0 %55
    %v57 = vrot.slane %v56, 4
    %v58 = vadd.f32 %v56, %v57
    %v59 = vrot.slane %v58, 2
    %v60 = vadd.f32 %v58, %v59
    %v61 = vrot.slane %v60, 1
    %v62 = vadd.f32 %v60, %v61
    %s63 = vtos %v62
    %v64 = vstv %s52
    %65 = vst [vmem:[#allocation7] sm:$0xff] %v64
    %v66 = vstv %s63
    %67 = vst [vmem:[#allocation8] sm:$0xff] %v66
    // Predicated region
    $region18: #{tpu_custom_call.1} parent=1 // pred_check
      _
    $region19: #{tpu_custom_call.1} parent=1 // pred_check_branch
      %69 = sbr.rel (0) target = $region21
    $region20: #{tpu_custom_call.1} parent=1 // pred_region
      %s71 = ssub.s32 128, 128
      %72 = vsyncadd [#allocation4], %s71
      %s74 = sshll.u32 [#allocation7], 4
      %s75 = int_to_ptr.vmem [resolvable:$true] %s74
      %77 = dma.vmem_to_hbm [thread:$0]  %s75, 128, %s2, [#allocation4]
    $region21: #{tpu_custom_call.1} parent=1 // pred_fallthru
      _
    // Predicated region
    $region22: #{tpu_custom_call.1} parent=1 // pred_check
      _
    $region23: #{tpu_custom_call.1} parent=1 // pred_check_branch
      %79 = sbr.rel (0) target = $region25
    $region24: #{tpu_custom_call.1} parent=1 // pred_region
      %s81 = ssub.s32 128, 128
      %82 = vsyncadd [#allocation9], %s81
      %s84 = sshll.u32 [#allocation8], 4
      %s85 = int_to_ptr.vmem [resolvable:$true] %s84
      %87 = dma.vmem_to_hbm [thread:$0]  %s85, 128, %s3, [#allocation9]
    $region25: #{tpu_custom_call.1} parent=1 // pred_fallthru
      _
    // Predicated region
    $region26: #{tpu_custom_call.1} parent=1 // pred_check
      _
    $region27: #{tpu_custom_call.1} parent=1 // pred_check_branch
      %89 = sbr.rel (0) target = $region29
    $region28: #{tpu_custom_call.1} parent=1 // pred_region
      %90 = dma.done [#allocation4], 128
    $region29: #{tpu_custom_call.1} parent=1 // pred_fallthru
      _
    // Predicated region
    $region30: #{tpu_custom_call.1} parent=1 // pred_check
      _
    $region31: #{tpu_custom_call.1} parent=1 // pred_check_branch
      %92 = sbr.rel (0) target = $region33
    $region32: #{tpu_custom_call.1} parent=1 // pred_region
      %93 = dma.done [#allocation9], 128
    $region33: #{tpu_custom_call.1} parent=1 // pred_fallthru
      _
    %94 = vsyncpa [#allocation3], 1
    %95 = vsyncpa [#allocation6], 1
    %96 = vsyncpa [#allocation4], 1
    %97 = vsyncpa [#allocation9], 1

</llo_original>
